<compile_context>
chip_gen: v7x
topology: tpu7x:2x2x1
jax: 0.10.0
libtpu: 0.0.40
codegen_flags: <defaults>
</compile_context>

<pallas_src>
import jax
import jax.numpy as jnp
from jax.experimental import pallas as pl
from jax.experimental.pallas import tpu as pltpu

EPS = 1e-5  # PyTorch BatchNorm1d default


def _round_up(n, m):
    return ((n + m - 1) // m) * m


def _num_tensorcores():
    try:
        kind = jax.devices()[0].device_kind.lower()
    except Exception:
        return 1
    return 2 if "7" in kind else 1  # v7x has 2 TensorCores per chip


def _pick_tb(batch, tb):
    tb = max(128, (int(tb) // 128) * 128)
    cores = _num_tensorcores()
    if cores > 1 and batch >= 2 * cores * 2048:
        # >=2 grid steps per TensorCore so "parallel" actually engages both cores,
        # while keeping each step >= 2048 lanes (per-step overhead amortized).
        tb = min(tb, _round_up(-(-batch // (2 * cores)), 128))
    return max(128, min(tb, _round_up(batch, 128)))


def _mlp_kernel(
    x_ref,            # (TB, D)  f32, batch-major as stored in HBM
    w1_ref, b1_ref,   # (64, D)  bf16, (64, 1) f32  -- BN folded in
    w2_ref, b2_ref,   # (32, 64) bf16, (32, 1) f32
    w3_ref, b3_ref,   # (16, 32) bf16, (16, 1) f32
    w4_ref, b4_ref,   # (1, 16)  bf16, (1, 1)  f32
    out_ref,          # (1, TB)  f32
):
    xb = x_ref[...].astype(jnp.bfloat16)                       # (TB, D)
    # Layer 1: contract D of W1 against D of x (A @ B^T) -> (64, TB); batch on lanes.
    h = jax.lax.dot_general(
        w1_ref[...], xb, (((1,), (1,)), ((), ())),
        preferred_element_type=jnp.float32)
    h = jnp.maximum(h + b1_ref[...], 0.0).astype(jnp.bfloat16)
    h = jnp.dot(w2_ref[...], h, preferred_element_type=jnp.float32)
    h = jnp.maximum(h + b2_ref[...], 0.0).astype(jnp.bfloat16)
    h = jnp.dot(w3_ref[...], h, preferred_element_type=jnp.float32)
    h = jnp.maximum(h + b3_ref[...], 0.0).astype(jnp.bfloat16)
    # Final Linear(16, 1); Dropout is identity in eval mode.
    y = jnp.dot(w4_ref[...], h, preferred_element_type=jnp.float32) + b4_ref[...]
    out_ref[...] = y.astype(out_ref.dtype)


def _fold_bn(w, b, gamma, beta, mean, var):
    """Fold eval-mode BatchNorm1d into the preceding Linear (PyTorch (out,in) layout)."""
    scale = gamma * jax.lax.rsqrt(var + EPS)          # (out,)
    w_f = w * scale[:, None]                          # (out, in)
    b_f = (b - mean) * scale + beta                   # (out,)
    return w_f, b_f.reshape(-1, 1)


def bike_volume_nn_forward(x, params, *, tb=8192):
    """x: (B, input_dim) float32 -> (B, 1) float32 (eval-mode forward)."""
    B, D = x.shape
    x = x.astype(jnp.float32)

    # One-time parameter folding (tiny arrays; done outside the kernel).
    folded = []
    for li in ("l1", "l2", "l3"):
        p = params[li]
        w_f, b_f = _fold_bn(p["w"], p["b"], p["gamma"], p["beta"], p["mean"], p["var"])
        folded += [w_f.astype(jnp.bfloat16), b_f.astype(jnp.float32)]
    folded += [params["l4"]["w"].astype(jnp.bfloat16),
               params["l4"]["b"].reshape(-1, 1).astype(jnp.float32)]

    tb = _pick_tb(B, tb)
    grid = (pl.cdiv(B, tb),)

    x_spec = pl.BlockSpec((tb, D), lambda i: (i, 0))
    out_spec = pl.BlockSpec((1, tb), lambda i: (0, i))
    # Whole-array, constant index map -> weights/biases stay VMEM-resident across steps.
    w_specs = [pl.BlockSpec(a.shape, lambda i: (0, 0)) for a in folded]

    # VMEM budget: x tile is lane-padded 16->128 (512 B/lane/buffer, double-buffered),
    # bf16 intermediates ~224 B/lane, out 8 B/lane; x2 cushion, capped at 64 MiB (v7x).
    vmem_bytes = int(min(64 << 20, max(32 << 20, 2 * tb * (2 * 512 + 224 + 8))))

    out = pl.pallas_call(
        _mlp_kernel,
        out_shape=jax.ShapeDtypeStruct((1, B), jnp.float32),
        grid=grid,
        in_specs=[x_spec] + w_specs,
        out_specs=out_spec,
        compiler_params=pltpu.CompilerParams(
            dimension_semantics=("parallel",),
            vmem_limit_bytes=vmem_bytes),
    )(x, *folded)

    return out.reshape(B, 1)


def init_params(key, input_dim):
    """Deterministic params matching BikeVolumeNN shapes (PyTorch (out, in) layout)."""
    dims = [(input_dim, 64), (64, 32), (32, 16), (16, 1)]
    params = {}
    keys = jax.random.split(key, len(dims) * 6)
    for i, (din, dout) in enumerate(dims):
        kw, kb, kg, kbe, km, kv = keys[6 * i: 6 * i + 6]
        bound = 1.0 / jnp.sqrt(jnp.float32(din))
        layer = {
            "w": jax.random.uniform(kw, (dout, din), jnp.float32, -bound, bound),
            "b": jax.random.uniform(kb, (dout,), jnp.float32, -bound, bound),
        }
        if i < 3:  # layers followed by BatchNorm1d
            layer["gamma"] = 1.0 + 0.1 * jax.random.normal(kg, (dout,), jnp.float32)
            layer["beta"] = 0.1 * jax.random.normal(kbe, (dout,), jnp.float32)
            layer["mean"] = 0.05 * jax.random.normal(km, (dout,), jnp.float32)
            layer["var"] = jnp.abs(1.0 + 0.1 * jax.random.normal(kv, (dout,), jnp.float32))
        params[f"l{i + 1}"] = layer
    return params


def _reference(x, params):
    """Pure-JAX f32 eval-mode reference (un-folded BN) for a sanity check."""
    h = x
    for li in ("l1", "l2", "l3"):
        p = params[li]
        y = h @ p["w"].T + p["b"]
        y = (y - p["mean"]) / jnp.sqrt(p["var"] + EPS) * p["gamma"] + p["beta"]
        h = jnp.maximum(y, 0.0)
    return h @ params["l4"]["w"].T + params["l4"]["b"]


if __name__ == "__main__":
    key = jax.random.PRNGKey(0)
    k_param, k_x1, k_x2 = jax.random.split(key, 3)

    input_dim = 16
    params = init_params(k_param, input_dim)

    # bf16 weights/activations (f32 accumulation) -> loosened tolerance vs f32 reference.
    ATOL = RTOL = 5e-2

    # Small-batch case (single grid step; partial 128-lane block, masked stores).
    batch = 8
    x = jax.random.normal(k_x1, (batch, input_dim), jnp.float32)
    out = jax.block_until_ready(bike_volume_nn_forward(x, params))
    ref = _reference(x, params)
    assert out.shape == (batch, 1)
    assert jnp.allclose(out, ref, atol=ATOL, rtol=RTOL), "mismatch vs reference (B=8)"

    # Multi-tile case exercising the batch grid + ragged last block (tb=128, grid=3).
    batch2 = 260
    x2 = jax.random.normal(k_x2, (batch2, input_dim), jnp.float32)
    out2 = jax.block_until_ready(bike_volume_nn_forward(x2, params, tb=128))
    ref2 = _reference(x2, params)
    assert out2.shape == (batch2, 1)
    assert jnp.allclose(out2, ref2, atol=ATOL, rtol=RTOL), "mismatch vs reference (B=260)"

    print("KERNEL_OK")
</pallas_src>

<mosaic_0001>
module attributes {stable_mosaic.version = 11 : i64} {
  func.func @_mlp_kernel(%arg0: i32, %arg1: memref<128x16xf32, #tpu.memory_space<vmem>>, %arg2: memref<64x16xbf16, #tpu.memory_space<vmem>>, %arg3: memref<64x1xf32, #tpu.memory_space<vmem>>, %arg4: memref<32x64xbf16, #tpu.memory_space<vmem>>, %arg5: memref<32x1xf32, #tpu.memory_space<vmem>>, %arg6: memref<16x32xbf16, #tpu.memory_space<vmem>>, %arg7: memref<16x1xf32, #tpu.memory_space<vmem>>, %arg8: memref<1x16xbf16, #tpu.memory_space<vmem>>, %arg9: memref<1x1xf32, #tpu.memory_space<vmem>>, %arg10: memref<1x128xf32, #tpu.memory_space<vmem>>) attributes {dimension_semantics = [#tpu.dimension_semantics<parallel>], iteration_bounds = array<i64: 1>, scalar_prefetch = 0 : i64, scratch_operands = 0 : i64, tpu.core_type = #tpu.core_type<tc>, window_params = [{transform_indices = @transform_0, window_bounds = array<i64: 128, 16>}, {pipeline_mode = #tpu.pipeline_mode<synchronous>, transform_indices = @transform_1, window_bounds = array<i64: 64, 16>}, {pipeline_mode = #tpu.pipeline_mode<synchronous>, transform_indices = @transform_2, window_bounds = array<i64: 64, 1>}, {pipeline_mode = #tpu.pipeline_mode<synchronous>, transform_indices = @transform_3, window_bounds = array<i64: 32, 64>}, {pipeline_mode = #tpu.pipeline_mode<synchronous>, transform_indices = @transform_4, window_bounds = array<i64: 32, 1>}, {pipeline_mode = #tpu.pipeline_mode<synchronous>, transform_indices = @transform_5, window_bounds = array<i64: 16, 32>}, {pipeline_mode = #tpu.pipeline_mode<synchronous>, transform_indices = @transform_6, window_bounds = array<i64: 16, 1>}, {pipeline_mode = #tpu.pipeline_mode<synchronous>, transform_indices = @transform_7, window_bounds = array<i64: 1, 16>}, {pipeline_mode = #tpu.pipeline_mode<synchronous>, transform_indices = @transform_8, window_bounds = array<i64: 1, 1>}, {transform_indices = @transform_9, window_bounds = array<i64: 1, 128>}]} {
    %c0 = arith.constant 0 : index
    %c0_0 = arith.constant 0 : index
    %0 = vector.load %arg1[%c0, %c0_0] : memref<128x16xf32, #tpu.memory_space<vmem>>, vector<128x16xf32>
    %1 = arith.truncf %0 : vector<128x16xf32> to vector<128x16xbf16>
    %c0_1 = arith.constant 0 : index
    %c0_2 = arith.constant 0 : index
    %2 = vector.load %arg2[%c0_1, %c0_2] : memref<64x16xbf16, #tpu.memory_space<vmem>>, vector<64x16xbf16>
    %cst = arith.constant dense<0.000000e+00> : vector<64x128xf32>
    %3 = tpu.matmul %2, %1, %cst {dimension_numbers = #tpu.dot_dimension_numbers<[1], [1], [0], [0], [0, 0, 1, 0], [], []>} : vector<64x16xbf16>, vector<128x16xbf16>, vector<64x128xf32> -> vector<64x128xf32>
    %c0_3 = arith.constant 0 : index
    %c0_4 = arith.constant 0 : index
    %4 = vector.load %arg3[%c0_3, %c0_4] : memref<64x1xf32, #tpu.memory_space<vmem>>, vector<64x1xf32>
    %5 = vector.broadcast %4 : vector<64x1xf32> to vector<64x128xf32>
    %6 = arith.addf %3, %5 : vector<64x128xf32>
    %cst_5 = arith.constant 0.000000e+00 : f32
    %7 = vector.broadcast %cst_5 : f32 to vector<64x128xf32>
    %8 = arith.maximumf %6, %7 : vector<64x128xf32>
    %9 = arith.truncf %8 : vector<64x128xf32> to vector<64x128xbf16>
    %c0_6 = arith.constant 0 : index
    %c0_7 = arith.constant 0 : index
    %10 = vector.load %arg4[%c0_6, %c0_7] : memref<32x64xbf16, #tpu.memory_space<vmem>>, vector<32x64xbf16>
    %cst_8 = arith.constant dense<0.000000e+00> : vector<32x128xf32>
    %11 = tpu.matmul %10, %9, %cst_8 {dimension_numbers = #tpu.dot_dimension_numbers<[1], [0], [0], [1], [0, 0, 1, 1], [], []>} : vector<32x64xbf16>, vector<64x128xbf16>, vector<32x128xf32> -> vector<32x128xf32>
    %c0_9 = arith.constant 0 : index
    %c0_10 = arith.constant 0 : index
    %12 = vector.load %arg5[%c0_9, %c0_10] : memref<32x1xf32, #tpu.memory_space<vmem>>, vector<32x1xf32>
    %13 = vector.broadcast %12 : vector<32x1xf32> to vector<32x128xf32>
    %14 = arith.addf %11, %13 : vector<32x128xf32>
    %cst_11 = arith.constant 0.000000e+00 : f32
    %15 = vector.broadcast %cst_11 : f32 to vector<32x128xf32>
    %16 = arith.maximumf %14, %15 : vector<32x128xf32>
    %17 = arith.truncf %16 : vector<32x128xf32> to vector<32x128xbf16>
    %c0_12 = arith.constant 0 : index
    %c0_13 = arith.constant 0 : index
    %18 = vector.load %arg6[%c0_12, %c0_13] : memref<16x32xbf16, #tpu.memory_space<vmem>>, vector<16x32xbf16>
    %cst_14 = arith.constant dense<0.000000e+00> : vector<16x128xf32>
    %19 = tpu.matmul %18, %17, %cst_14 {dimension_numbers = #tpu.dot_dimension_numbers<[1], [0], [0], [1], [0, 0, 1, 1], [], []>} : vector<16x32xbf16>, vector<32x128xbf16>, vector<16x128xf32> -> vector<16x128xf32>
    %c0_15 = arith.constant 0 : index
    %c0_16 = arith.constant 0 : index
    %20 = vector.load %arg7[%c0_15, %c0_16] : memref<16x1xf32, #tpu.memory_space<vmem>>, vector<16x1xf32>
    %21 = vector.broadcast %20 : vector<16x1xf32> to vector<16x128xf32>
    %22 = arith.addf %19, %21 : vector<16x128xf32>
    %cst_17 = arith.constant 0.000000e+00 : f32
    %23 = vector.broadcast %cst_17 : f32 to vector<16x128xf32>
    %24 = arith.maximumf %22, %23 : vector<16x128xf32>
    %25 = arith.truncf %24 : vector<16x128xf32> to vector<16x128xbf16>
    %c0_18 = arith.constant 0 : index
    %c0_19 = arith.constant 0 : index
    %26 = vector.load %arg8[%c0_18, %c0_19] : memref<1x16xbf16, #tpu.memory_space<vmem>>, vector<1x16xbf16>
    %cst_20 = arith.constant dense<0.000000e+00> : vector<1x128xf32>
    %27 = tpu.matmul %26, %25, %cst_20 {dimension_numbers = #tpu.dot_dimension_numbers<[1], [0], [0], [1], [0, 0, 1, 1], [], []>} : vector<1x16xbf16>, vector<16x128xbf16>, vector<1x128xf32> -> vector<1x128xf32>
    %c0_21 = arith.constant 0 : index
    %c0_22 = arith.constant 0 : index
    %28 = vector.load %arg9[%c0_21, %c0_22] : memref<1x1xf32, #tpu.memory_space<vmem>>, vector<1x1xf32>
    %29 = vector.broadcast %28 : vector<1x1xf32> to vector<1x128xf32>
    %30 = arith.addf %27, %29 : vector<1x128xf32>
    %c0_23 = arith.constant 0 : index
    %c0_24 = arith.constant 0 : index
    %31 = vector.load %arg10[%c0_23, %c0_24] : memref<1x128xf32, #tpu.memory_space<vmem>>, vector<1x128xf32>
    tpu.vector_store %arg10[%c0_23, %c0_24], %30 {strides = array<i32>} : memref<1x128xf32, #tpu.memory_space<vmem>>, vector<1x128xf32>,
    return
  }
  func.func @transform_0(%arg0: i32) -> (i32, i32) {
    %c0_i32 = arith.constant 0 : i32
    %c0_i32_0 = arith.constant 0 : i32
    return %arg0, %c0_i32 : i32, i32
  }
  func.func @transform_1(%arg0: i32) -> (i32, i32) {
    %c0_i32 = arith.constant 0 : i32
    %c0_i32_0 = arith.constant 0 : i32
    %c0_i32_1 = arith.constant 0 : i32
    return %c0_i32, %c0_i32_0 : i32, i32
  }
  func.func @transform_2(%arg0: i32) -> (i32, i32) {
    %c0_i32 = arith.constant 0 : i32
    %c0_i32_0 = arith.constant 0 : i32
    %c0_i32_1 = arith.constant 0 : i32
    return %c0_i32, %c0_i32_0 : i32, i32
  }
  func.func @transform_3(%arg0: i32) -> (i32, i32) {
    %c0_i32 = arith.constant 0 : i32
    %c0_i32_0 = arith.constant 0 : i32
    %c0_i32_1 = arith.constant 0 : i32
    return %c0_i32, %c0_i32_0 : i32, i32
  }
  func.func @transform_4(%arg0: i32) -> (i32, i32) {
    %c0_i32 = arith.constant 0 : i32
    %c0_i32_0 = arith.constant 0 : i32
    %c0_i32_1 = arith.constant 0 : i32
    return %c0_i32, %c0_i32_0 : i32, i32
  }
  func.func @transform_5(%arg0: i32) -> (i32, i32) {
    %c0_i32 = arith.constant 0 : i32
    %c0_i32_0 = arith.constant 0 : i32
    %c0_i32_1 = arith.constant 0 : i32
    return %c0_i32, %c0_i32_0 : i32, i32
  }
  func.func @transform_6(%arg0: i32) -> (i32, i32) {
    %c0_i32 = arith.constant 0 : i32
    %c0_i32_0 = arith.constant 0 : i32
    %c0_i32_1 = arith.constant 0 : i32
    return %c0_i32, %c0_i32_0 : i32, i32
  }
  func.func @transform_7(%arg0: i32) -> (i32, i32) {
    %c0_i32 = arith.constant 0 : i32
    %c0_i32_0 = arith.constant 0 : i32
    %c0_i32_1 = arith.constant 0 : i32
    return %c0_i32, %c0_i32_0 : i32, i32
  }
  func.func @transform_8(%arg0: i32) -> (i32, i32) {
    %c0_i32 = arith.constant 0 : i32
    %c0_i32_0 = arith.constant 0 : i32
    %c0_i32_1 = arith.constant 0 : i32
    return %c0_i32, %c0_i32_0 : i32, i32
  }
  func.func @transform_9(%arg0: i32) -> (i32, i32) {
    %c0_i32 = arith.constant 0 : i32
    %c0_i32_0 = arith.constant 0 : i32
    return %c0_i32, %arg0 : i32, i32
  }
}

</mosaic_0001>

<llo_original>
// kernel: tpu_custom_call.1
$region0: #{tpu_custom_call.1}
  #allocation0 [shape = 'u32[]', space=smem, size = 0x4, offset = 0x4, fixed_abs, tag = 'smem constant byte address 0x4 - core index']
  #allocation1 [shape = 'u32[144,128]{1,0:T(1,128)}', space=vmem, size = 0x12000, scoped, tag = 'internal scratch']
  #allocation2 [shape = 'f32[1,1]{1,0:T(1,128)S(1)}', space=vmem, size = 0x200, scoped, tag = 'scoped memory for tpu_custom_call.1']
  %s0 = inlined_call_operand.vmem [shape: f32[8,16], index: 0, kind: input, shape index: {}]
  %s1 = inlined_call_operand.vmem [shape: bf16[64,16], index: 1, kind: input, shape index: {}]
  %s2 = inlined_call_operand.vmem [shape: f32[64,1], index: 2, kind: input, shape index: {}]
  %s3 = inlined_call_operand.vmem [shape: bf16[32,64], index: 3, kind: input, shape index: {}]
  %s4 = inlined_call_operand.vmem [shape: f32[32,1], index: 4, kind: input, shape index: {}]
  %s5 = inlined_call_operand.vmem [shape: bf16[16,32], index: 5, kind: input, shape index: {}]
  %s6 = inlined_call_operand.vmem [shape: f32[16,1], index: 6, kind: input, shape index: {}]
  %s7 = inlined_call_operand.vmem [shape: bf16[1,16], index: 7, kind: input, shape index: {}]
  %s8 = inlined_call_operand.<no memory space> [shape: f32[1,1], index: 8, kind: input, shape index: {}]
  %s9 = inlined_call_operand.hbm [shape: f32[1,8], index: 9, kind: output, shape index: {}]
  %s10 = sld [smem:[#allocation0]]
  $region46: #{tpu_custom_call.1} parent=0
    _
  %s12 = ssub.s32 1, %s10
  %s13 = scalar_select 0, %s12, %s10
  %v14 = vstv %s8
  %15 = vst [vmem:[#allocation2] sm:$0x1] %v14
  $region1: #{tpu_custom_call.1} parent=0
    #allocation3 [shape = 'u8[512]{0}', space=vmem, size = 0x400, scoped, tag = 'output window, operand 0, single buffered']
    #allocation4 [shape = 's32[1]{0}', space=sflag, size = 0x4, scoped, tag = 'scoped memory for tpu_custom_call.1']
    %16 = vsyncpa [#allocation4], 0
    // Predicated region
    $region2: #{tpu_custom_call.1} parent=1 // pred_check
      _
    $region3: #{tpu_custom_call.1} parent=1 // pred_check_branch
      %18 = sbr.rel (0) target = $region5
    $region4: #{tpu_custom_call.1} parent=1 // pred_region
      _
    $region5: #{tpu_custom_call.1} parent=1 // pred_fallthru
      _
    // Predicated region
    $region6: #{tpu_custom_call.1} parent=1 // pred_check
      _
    $region7: #{tpu_custom_call.1} parent=1 // pred_check_branch
      %20 = sbr.rel (0) target = $region9
    $region8: #{tpu_custom_call.1} parent=1 // pred_region
      _
    $region9: #{tpu_custom_call.1} parent=1 // pred_fallthru
      _
    // Predicated region
    $region10: #{tpu_custom_call.1} parent=1 // pred_check
      _
    $region11: #{tpu_custom_call.1} parent=1 // pred_check_branch
      %22 = sbr.rel (0) target = $region13
    $region12: #{tpu_custom_call.1} parent=1 // pred_region
      _
    $region13: #{tpu_custom_call.1} parent=1 // pred_fallthru
      _
    // Predicated region
    $region14: #{tpu_custom_call.1} parent=1 // pred_check
      _
    $region15: #{tpu_custom_call.1} parent=1 // pred_check_branch
      %24 = sbr.rel (0) target = $region17
    $region16: #{tpu_custom_call.1} parent=1 // pred_region
      _
    $region17: #{tpu_custom_call.1} parent=1 // pred_fallthru
      _
    // Predicated region
    $region18: #{tpu_custom_call.1} parent=1 // pred_check
      _
    $region19: #{tpu_custom_call.1} parent=1 // pred_check_branch
      %26 = sbr.rel (0) target = $region21
    $region20: #{tpu_custom_call.1} parent=1 // pred_region
      _
    $region21: #{tpu_custom_call.1} parent=1 // pred_fallthru
      _
    // Predicated region
    $region22: #{tpu_custom_call.1} parent=1 // pred_check
      _
    $region23: #{tpu_custom_call.1} parent=1 // pred_check_branch
      %28 = sbr.rel (0) target = $region25
    $region24: #{tpu_custom_call.1} parent=1 // pred_region
      _
    $region25: #{tpu_custom_call.1} parent=1 // pred_fallthru
      _
    // Predicated region
    $region26: #{tpu_custom_call.1} parent=1 // pred_check
      _
    $region27: #{tpu_custom_call.1} parent=1 // pred_check_branch
      %30 = sbr.rel (0) target = $region29
    $region28: #{tpu_custom_call.1} parent=1 // pred_region
      _
    $region29: #{tpu_custom_call.1} parent=1 // pred_fallthru
      _
    // Predicated region
    $region30: #{tpu_custom_call.1} parent=1 // pred_check
      _
    $region31: #{tpu_custom_call.1} parent=1 // pred_check_branch
      %32 = sbr.rel (0) target = $region33
    $region32: #{tpu_custom_call.1} parent=1 // pred_region
      _
    $region33: #{tpu_custom_call.1} parent=1 // pred_fallthru
      _
    // Predicated region
    $region34: #{tpu_custom_call.1} parent=1 // pred_check
      _
    $region35: #{tpu_custom_call.1} parent=1 // pred_check_branch
      %34 = sbr.rel (0) target = $region37
    $region36: #{tpu_custom_call.1} parent=1 // pred_region
      _
    $region37: #{tpu_custom_call.1} parent=1 // pred_fallthru
      _
    %v36 = vld [vmem:[%s0] sm:$0xff]
    %v37 = vld [vmem:[%s0 + $0x8] sm:$0xff]
    %v38 = vld [vmem:[%s0 + $0x10] sm:$0xff]
    %v39 = vld [vmem:[%s0 + $0x18] sm:$0xff]
    %v40 = vld [vmem:[%s0 + $0x20] sm:$0xff]
    %v41 = vld [vmem:[%s0 + $0x28] sm:$0xff]
    %v42 = vld [vmem:[%s0 + $0x30] sm:$0xff]
    %v43 = vld [vmem:[%s0 + $0x38] sm:$0xff]
    %v44 = vld [vmem:[%s0 + $0x40] sm:$0xff]
    %v45 = vld [vmem:[%s0 + $0x48] sm:$0xff]
    %v46 = vld [vmem:[%s0 + $0x50] sm:$0xff]
    %v47 = vld [vmem:[%s0 + $0x58] sm:$0xff]
    %v48 = vld [vmem:[%s0 + $0x60] sm:$0xff]
    %v49 = vld [vmem:[%s0 + $0x68] sm:$0xff]
    %v50 = vld [vmem:[%s0 + $0x70] sm:$0xff]
    %v51 = vld [vmem:[%s0 + $0x78] sm:$0xff]
    %v52 = vpack.c.bf16 %v37, %v36
    %v53 = vpack.c.bf16 %v39, %v38
    %v54 = vpack.c.bf16 %v41, %v40
    %v55 = vpack.c.bf16 %v43, %v42
    %v56 = vpack.c.bf16 %v45, %v44
    %v57 = vpack.c.bf16 %v47, %v46
    %v58 = vpack.c.bf16 %v49, %v48
    %v59 = vpack.c.bf16 %v51, %v50
    %v60 = vld [vmem:[%s1] sm:$0xf]
    %v61 = vld [vmem:[%s1 + $0x4] sm:$0xf]
    %v62 = vld [vmem:[%s1 + $0x8] sm:$0xf]
    %v63 = vld [vmem:[%s1 + $0xc] sm:$0xf]
    %v64 = vld [vmem:[%s1 + $0x10] sm:$0xf]
    %v65 = vld [vmem:[%s1 + $0x14] sm:$0xf]
    %v66 = vld [vmem:[%s1 + $0x18] sm:$0xf]
    %v67 = vld [vmem:[%s1 + $0x1c] sm:$0xf]
    %v68 = vld [vmem:[%s2] sm:$0xff]
    %v69 = vld [vmem:[%s2 + $0x8] sm:$0xff]
    %v70 = vld [vmem:[%s2 + $0x10] sm:$0xff]
    %v71 = vld [vmem:[%s2 + $0x18] sm:$0xff]
    %v72 = vld [vmem:[%s2 + $0x20] sm:$0xff]
    %v73 = vld [vmem:[%s2 + $0x28] sm:$0xff]
    %v74 = vld [vmem:[%s2 + $0x30] sm:$0xff]
    %v75 = vld [vmem:[%s2 + $0x38] sm:$0xff]
    %77 = vset.pattern.permute.xlu0 0
    %78 = vperm.xlu0 %77, %v68
    %v79 = vpop.permute.xlu0 %78
    %82 = vset.pattern.permute.xlu0 0
    %83 = vperm.xlu0 %82, %v69
    %v84 = vpop.permute.xlu0 %83
    %87 = vset.pattern.permute.xlu0 0
    %88 = vperm.xlu0 %87, %v70
    %v89 = vpop.permute.xlu0 %88
    %92 = vset.pattern.permute.xlu0 0
    %93 = vperm.xlu0 %92, %v71
    %v94 = vpop.permute.xlu0 %93
    %97 = vset.pattern.permute.xlu0 0
    %98 = vperm.xlu0 %97, %v72
    %v99 = vpop.permute.xlu0 %98
    %102 = vset.pattern.permute.xlu0 0
    %103 = vperm.xlu0 %102, %v73
    %v104 = vpop.permute.xlu0 %103
    %107 = vset.pattern.permute.xlu0 0
    %108 = vperm.xlu0 %107, %v74
    %v109 = vpop.permute.xlu0 %108
    %112 = vset.pattern.permute.xlu0 0
    %113 = vperm.xlu0 %112, %v75
    %v114 = vpop.permute.xlu0 %113
    %v124 = vunpack.c.l.b16 %v60
    %v125 = vunpack.c.l.b16 %v61
    %v126 = vunpack.c.l.b16 %v62
    %v127 = vunpack.c.l.b16 %v63
    %v128 = vunpack.c.l.b16 %v64
    %v129 = vunpack.c.l.b16 %v65
    %v130 = vunpack.c.l.b16 %v66
    %v131 = vunpack.c.l.b16 %v67
    %v132 = vpack.c.b16 %v125, %v124
    %v133 = vpack.c.b16 %v127, %v126
    %v134 = vpack.c.b16 %v129, %v128
    %v135 = vpack.c.b16 %v131, %v130
    %vm136 = vcmask 130048
    %v138 = vsel %vm136, %v132, 0
    %v141 = vsel %vm136, %v133, 0
    %v144 = vsel %vm136, %v134, 0
    %v147 = vsel %vm136, %v135, 0
    %v150 = vsel %vm136, %v52, 0
    %v153 = vsel %vm136, %v53, 0
    %v156 = vsel %vm136, %v54, 0
    %v159 = vsel %vm136, %v55, 0
    %v162 = vsel %vm136, %v56, 0
    %v165 = vsel %vm136, %v57, 0
    %v168 = vsel %vm136, %v58, 0
    %v171 = vsel %vm136, %v59, 0
    %173 = vmatprep.subr.bf16.mxu0 0
    %174 = vmatpush1.bf16.xpose.msra.mxu0 %v150
    %175 = vmatprep.subr.bf16.mxu0 0
    %176 = vmatpush1.bf16.xpose.msra.mxu0 %v153
    %177 = vmatprep.subr.bf16.mxu0 0
    %178 = vmatpush1.bf16.xpose.msra.mxu0 %v156
    %179 = vmatprep.subr.bf16.mxu0 0
    %180 = vmatpush1.bf16.xpose.msra.mxu0 %v159
    %181 = vmatprep.subr.bf16.mxu0 0
    %182 = vmatpush1.bf16.xpose.msra.mxu0 %v162
    %183 = vmatprep.subr.bf16.mxu0 0
    %184 = vmatpush1.bf16.xpose.msra.mxu0 %v165
    %185 = vmatprep.subr.bf16.mxu0 0
    %186 = vmatpush1.bf16.xpose.msra.mxu0 %v168
    %187 = vmatprep.subr.bf16.mxu0 0
    %188 = vmatpush1.bf16.xpose.msra.mxu0 %v171
    %189 = vmatprep.subr.bf16.mxu0 0
    %190 = vmatpush1.bf16.xpose.msra.mxu0 0
    %191 = vmatprep.subr.bf16.mxu0 0
    %192 = vmatpush1.bf16.xpose.msra.mxu0 0
    %193 = vmatprep.subr.bf16.mxu0 0
    %194 = vmatpush1.bf16.xpose.msra.mxu0 0
    %195 = vmatprep.subr.bf16.mxu0 0
    %196 = vmatpush1.bf16.xpose.msra.mxu0 0
    %197 = vmatprep.subr.bf16.mxu0 0
    %198 = vmatpush1.bf16.xpose.msra.mxu0 0
    %199 = vmatprep.subr.bf16.mxu0 0
    %200 = vmatpush1.bf16.xpose.msra.mxu0 0
    %201 = vmatprep.subr.bf16.mxu0 0
    %202 = vmatpush1.bf16.xpose.msra.mxu0 0
    %203 = vmatprep.subr.bf16.mxu0 0
    %204 = vmatpush1.bf16.xpose.msra.mxu0 0
    %205 = vmatprep.mubr.bf16.mxu0 0
    %206 = vmatmul.mubr.bf16.gmra.mrb[0].mxu0 %v138
    %v207 = vpop.f32.mrb[0].mxu0
    %v208 = vadd.f32 %v79, %v207
    %v209 = vpop.f32.mrb[0].mxu0
    %v210 = vpop.f32.mrb[0].mxu0
    %v211 = vadd.f32 %v84, %v210
    %v212 = vpop.f32.mrb[0].mxu0
    %213 = vmatprep.mubr.bf16.mxu0 0
    %214 = vmatmul.mubr.bf16.gmra.mrb[0].mxu0 %v141
    %v215 = vpop.f32.mrb[0].mxu0
    %v216 = vadd.f32 %v89, %v215
    %v217 = vpop.f32.mrb[0].mxu0
    %v218 = vpop.f32.mrb[0].mxu0
    %v219 = vadd.f32 %v94, %v218
    %v220 = vpop.f32.mrb[0].mxu0
    %221 = vmatprep.mubr.bf16.mxu0 0
    %222 = vmatmul.mubr.bf16.gmra.mrb[0].mxu0 %v144
    %v223 = vpop.f32.mrb[0].mxu0
    %v224 = vadd.f32 %v99, %v223
    %v225 = vpop.f32.mrb[0].mxu0
    %v226 = vpop.f32.mrb[0].mxu0
    %v227 = vadd.f32 %v104, %v226
    %v228 = vpop.f32.mrb[0].mxu0
    %229 = vmatprep.mubr.bf16.mxu0 0
    %230 = vmatmul.mubr.bf16.gmra.mrb[0].mxu0 %v147
    %v231 = vpop.f32.mrb[0].mxu0
    %v232 = vadd.f32 %v109, %v231
    %v233 = vpop.f32.mrb[0].mxu0
    %v234 = vpop.f32.mrb[0].mxu0
    %v235 = vadd.f32 %v114, %v234
    %v236 = vpop.f32.mrb[0].mxu0
    %237 = vdwg.mxu0
    %v238 = vmax.f32 %v208, 0.0
    %v239 = vmax.f32 %v211, 0.0
    %v240 = vmax.f32 %v216, 0.0
    %v241 = vmax.f32 %v219, 0.0
    %v242 = vmax.f32 %v224, 0.0
    %v243 = vmax.f32 %v227, 0.0
    %v244 = vmax.f32 %v232, 0.0
    %v245 = vmax.f32 %v235, 0.0
    %v246 = vpack.c.bf16 %v239, %v238
    %v247 = vpack.c.bf16 %v241, %v240
    %v248 = vpack.c.bf16 %v243, %v242
    %v249 = vpack.c.bf16 %v245, %v244
    %v250 = vld [vmem:[%s3] sm:$0xf]
    %v251 = vld [vmem:[%s3 + $0x4] sm:$0xf]
    %v252 = vld [vmem:[%s3 + $0x8] sm:$0xf]
    %v253 = vld [vmem:[%s3 + $0xc] sm:$0xf]
    %v254 = vld [vmem:[%s4] sm:$0xff]
    %v255 = vld [vmem:[%s4 + $0x8] sm:$0xff]
    %v256 = vld [vmem:[%s4 + $0x10] sm:$0xff]
    %v257 = vld [vmem:[%s4 + $0x18] sm:$0xff]
    %259 = vset.pattern.permute.xlu0 0
    %260 = vperm.xlu0 %259, %v254
    %v261 = vpop.permute.xlu0 %260
    %264 = vset.pattern.permute.xlu0 0
    %265 = vperm.xlu0 %264, %v255
    %v266 = vpop.permute.xlu0 %265
    %269 = vset.pattern.permute.xlu0 0
    %270 = vperm.xlu0 %269, %v256
    %v271 = vpop.permute.xlu0 %270
    %274 = vset.pattern.permute.xlu0 0
    %275 = vperm.xlu0 %274, %v257
    %v276 = vpop.permute.xlu0 %275
    %v282 = vunpack.c.l.b16 %v250
    %v283 = vunpack.c.l.b16 %v251
    %v284 = vunpack.c.l.b16 %v252
    %v285 = vunpack.c.l.b16 %v253
    %v286 = vpack.c.b16 %v283, %v282
    %v287 = vpack.c.b16 %v285, %v284
    %vm288 = vcmask 523264
    %v290 = vsel %vm288, %v286, 0
    %v293 = vsel %vm288, %v287, 0
    %295 = vmatprep.subr.bf16.mxu0 0
    %296 = vmatpush1.bf16.msra.mxu0 %v246
    %297 = vmatprep.subr.bf16.mxu0 0
    %298 = vmatpush1.bf16.msra.mxu0 %v247
    %299 = vmatprep.subr.bf16.mxu0 0
    %300 = vmatpush1.bf16.msra.mxu0 %v248
    %301 = vmatprep.subr.bf16.mxu0 0
    %302 = vmatpush1.bf16.msra.mxu0 %v249
    %303 = vmatprep.subr.bf16.mxu0 0
    %304 = vmatpush1.bf16.msra.mxu0 0
    %305 = vmatprep.subr.bf16.mxu0 0
    %306 = vmatpush1.bf16.msra.mxu0 0
    %307 = vmatprep.subr.bf16.mxu0 0
    %308 = vmatpush1.bf16.msra.mxu0 0
    %309 = vmatprep.subr.bf16.mxu0 0
    %310 = vmatpush1.bf16.msra.mxu0 0
    %311 = vmatprep.subr.bf16.mxu0 0
    %312 = vmatpush1.bf16.msra.mxu0 0
    %313 = vmatprep.subr.bf16.mxu0 0
    %314 = vmatpush1.bf16.msra.mxu0 0
    %315 = vmatprep.subr.bf16.mxu0 0
    %316 = vmatpush1.bf16.msra.mxu0 0
    %317 = vmatprep.subr.bf16.mxu0 0
    %318 = vmatpush1.bf16.msra.mxu0 0
    %319 = vmatprep.subr.bf16.mxu0 0
    %320 = vmatpush1.bf16.msra.mxu0 0
    %321 = vmatprep.subr.bf16.mxu0 0
    %322 = vmatpush1.bf16.msra.mxu0 0
    %323 = vmatprep.subr.bf16.mxu0 0
    %324 = vmatpush1.bf16.msra.mxu0 0
    %325 = vmatprep.subr.bf16.mxu0 0
    %326 = vmatpush1.bf16.msra.mxu0 0
    %327 = vmatprep.mubr.bf16.mxu0 0
    %328 = vmatmul.mubr.bf16.gmra.mrb[0].mxu0 %v290
    %v329 = vpop.f32.mrb[0].mxu0
    %v330 = vadd.f32 %v261, %v329
    %v331 = vpop.f32.mrb[0].mxu0
    %v332 = vpop.f32.mrb[0].mxu0
    %v333 = vadd.f32 %v266, %v332
    %v334 = vpop.f32.mrb[0].mxu0
    %335 = vmatprep.mubr.bf16.mxu0 0
    %336 = vmatmul.mubr.bf16.gmra.mrb[0].mxu0 %v293
    %v337 = vpop.f32.mrb[0].mxu0
    %v338 = vadd.f32 %v271, %v337
    %v339 = vpop.f32.mrb[0].mxu0
    %v340 = vpop.f32.mrb[0].mxu0
    %v341 = vadd.f32 %v276, %v340
    %v342 = vpop.f32.mrb[0].mxu0
    %343 = vdwg.mxu0
    %v344 = vmax.f32 %v330, 0.0
    %v345 = vmax.f32 %v333, 0.0
    %v346 = vmax.f32 %v338, 0.0
    %v347 = vmax.f32 %v341, 0.0
    %v348 = vpack.c.bf16 %v345, %v344
    %v349 = vpack.c.bf16 %v347, %v346
    %v350 = vld [vmem:[%s5] sm:$0xf]
    %v351 = vld [vmem:[%s5 + $0x4] sm:$0xf]
    %v352 = vld [vmem:[%s6] sm:$0xff]
    %v353 = vld [vmem:[%s6 + $0x8] sm:$0xff]
    %355 = vset.pattern.permute.xlu0 0
    %356 = vperm.xlu0 %355, %v352
    %v357 = vpop.permute.xlu0 %356
    %360 = vset.pattern.permute.xlu0 0
    %361 = vperm.xlu0 %360, %v353
    %v362 = vpop.permute.xlu0 %361
    %v366 = vunpack.c.l.b16 %v350
    %v367 = vunpack.c.l.b16 %v351
    %v368 = vpack.c.b16 %v367, %v366
    %vm369 = vcmask 261120
    %v371 = vsel %vm369, %v368, 0
    %373 = vmatprep.subr.bf16.mxu0 0
    %374 = vmatpush1.bf16.msra.mxu0 %v348
    %375 = vmatprep.subr.bf16.mxu0 0
    %376 = vmatpush1.bf16.msra.mxu0 %v349
    %377 = vmatprep.subr.bf16.mxu0 0
    %378 = vmatpush1.bf16.msra.mxu0 0
    %379 = vmatprep.subr.bf16.mxu0 0
    %380 = vmatpush1.bf16.msra.mxu0 0
    %381 = vmatprep.subr.bf16.mxu0 0
    %382 = vmatpush1.bf16.msra.mxu0 0
    %383 = vmatprep.subr.bf16.mxu0 0
    %384 = vmatpush1.bf16.msra.mxu0 0
    %385 = vmatprep.subr.bf16.mxu0 0
    %386 = vmatpush1.bf16.msra.mxu0 0
    %387 = vmatprep.subr.bf16.mxu0 0
    %388 = vmatpush1.bf16.msra.mxu0 0
    %389 = vmatprep.subr.bf16.mxu0 0
    %390 = vmatpush1.bf16.msra.mxu0 0
    %391 = vmatprep.subr.bf16.mxu0 0
    %392 = vmatpush1.bf16.msra.mxu0 0
    %393 = vmatprep.subr.bf16.mxu0 0
    %394 = vmatpush1.bf16.msra.mxu0 0
    %395 = vmatprep.subr.bf16.mxu0 0
    %396 = vmatpush1.bf16.msra.mxu0 0
    %397 = vmatprep.subr.bf16.mxu0 0
    %398 = vmatpush1.bf16.msra.mxu0 0
    %399 = vmatprep.subr.bf16.mxu0 0
    %400 = vmatpush1.bf16.msra.mxu0 0
    %401 = vmatprep.subr.bf16.mxu0 0
    %402 = vmatpush1.bf16.msra.mxu0 0
    %403 = vmatprep.subr.bf16.mxu0 0
    %404 = vmatpush1.bf16.msra.mxu0 0
    %405 = vmatprep.mubr.bf16.mxu0 0
    %406 = vmatmul.mubr.bf16.gmra.mrb[0].mxu0 %v371
    %v407 = vpop.f32.mrb[0].mxu0
    %v408 = vadd.f32 %v357, %v407
    %v409 = vpop.f32.mrb[0].mxu0
    %v410 = vpop.f32.mrb[0].mxu0
    %v411 = vadd.f32 %v362, %v410
    %v412 = vpop.f32.mrb[0].mxu0
    %413 = vdwg.mxu0
    %v414 = vmax.f32 %v408, 0.0
    %v415 = vmax.f32 %v411, 0.0
    %v416 = vpack.c.bf16 %v415, %v414
    %v417 = vld [vmem:[%s7] sm:$0x1]
    %v418 = vld [vmem:[#allocation2] sm:$0x1]
    %420 = vset.pattern.permute.xlu0 0
    %421 = vperm.xlu0 %420, %v418
    %v422 = vpop.permute.xlu0 %421
    %v424 = vlaneseq
    %v425 = vshrl.u32 %v424, 7
    %v426 = vsub.s32 0, %v425
    %v427 = vrot.slane %v422, %v426
    %v429 = vsel %vm136, %v417, 0
    %431 = vmatprep.subr.bf16.mxu0 0
    %432 = vmatpush1.bf16.msra.mxu0 %v416
    %433 = vmatprep.subr.bf16.mxu0 0
    %434 = vmatpush1.bf16.msra.mxu0 0
    %435 = vmatprep.subr.bf16.mxu0 0
    %436 = vmatpush1.bf16.msra.mxu0 0
    %437 = vmatprep.subr.bf16.mxu0 0
    %438 = vmatpush1.bf16.msra.mxu0 0
    %439 = vmatprep.subr.bf16.mxu0 0
    %440 = vmatpush1.bf16.msra.mxu0 0
    %441 = vmatprep.subr.bf16.mxu0 0
    %442 = vmatpush1.bf16.msra.mxu0 0
    %443 = vmatprep.subr.bf16.mxu0 0
    %444 = vmatpush1.bf16.msra.mxu0 0
    %445 = vmatprep.subr.bf16.mxu0 0
    %446 = vmatpush1.bf16.msra.mxu0 0
    %447 = vmatprep.subr.bf16.mxu0 0
    %448 = vmatpush1.bf16.msra.mxu0 0
    %449 = vmatprep.subr.bf16.mxu0 0
    %450 = vmatpush1.bf16.msra.mxu0 0
    %451 = vmatprep.subr.bf16.mxu0 0
    %452 = vmatpush1.bf16.msra.mxu0 0
    %453 = vmatprep.subr.bf16.mxu0 0
    %454 = vmatpush1.bf16.msra.mxu0 0
    %455 = vmatprep.subr.bf16.mxu0 0
    %456 = vmatpush1.bf16.msra.mxu0 0
    %457 = vmatprep.subr.bf16.mxu0 0
    %458 = vmatpush1.bf16.msra.mxu0 0
    %459 = vmatprep.subr.bf16.mxu0 0
    %460 = vmatpush1.bf16.msra.mxu0 0
    %461 = vmatprep.subr.bf16.mxu0 0
    %462 = vmatpush1.bf16.msra.mxu0 0
    %463 = vmatprep.mubr.bf16.mxu0 0
    %464 = vmatmul.mubr.bf16.gmra.mrb[0].mxu0 %v429
    %v465 = vpop.f32.mrb[0].mxu0
    %v466 = vadd.f32 %v427, %v465
    %v467 = vpop.f32.mrb[0].mxu0
    %v468 = vpop.f32.mrb[0].mxu0
    %v469 = vpop.f32.mrb[0].mxu0
    %470 = vdwg.mxu0
    %471 = vst [vmem:[#allocation3] sm:$0x1] %v466
    // Predicated region
    $region38: #{tpu_custom_call.1} parent=1 // pred_check
      _
    $region39: #{tpu_custom_call.1} parent=1 // pred_check_branch
      %473 = sbr.rel (0) target = $region41
    $region40: #{tpu_custom_call.1} parent=1 // pred_region
      %s475 = ssub.s32 16, 16
      %476 = vsyncadd [#allocation4], %s475
      %s478 = sshll.u32 [#allocation3], 4
      %s479 = int_to_ptr.vmem [resolvable:$true] %s478
      %481 = dma.vmem_to_hbm [thread:$0]  %s479, 16, %s9, [#allocation4]
    $region41: #{tpu_custom_call.1} parent=1 // pred_fallthru
      _
    // Predicated region
    $region42: #{tpu_custom_call.1} parent=1 // pred_check
      _
    $region43: #{tpu_custom_call.1} parent=1 // pred_check_branch
      %483 = sbr.rel (0) target = $region45
    $region44: #{tpu_custom_call.1} parent=1 // pred_region
      %484 = dma.done [#allocation4], 16
    $region45: #{tpu_custom_call.1} parent=1 // pred_fallthru
      _
    %485 = vsyncpa [#allocation4], 1

</llo_original>
